<compile_context>
chip_gen: v5e
topology: v5e:2x2
jax: 0.10.0
libtpu: 0.0.40
codegen_flags: <defaults>
</compile_context>

<pallas_src>
import functools

import jax
import jax.numpy as jnp
from jax import lax
from jax.experimental import pallas as pl
from jax.experimental.pallas import tpu as pltpu


# Contract last dims of both operands: x @ y.T without an explicit transpose.
_CONTRACT_LAST = (((1,), (1,)), ((), ()))


# ----------------------------------------------------------------------------
# Kernels
# ----------------------------------------------------------------------------
def _mmd_triplet_kernel(a_ref, p_ref, n_ref, o_ref, *, margin):
    """Fused triplet-MMD: o = relu(margin + MMD(a,p) - MMD(a,n)).

    The anchor-anchor (XX) term appears identically in both MMD values and
    cancels in the difference, so it is dropped; the per-pair partials are
    therefore NOT valid MMD values on their own.
    """
    a = a_ref[...]                                      # (N, D) native dtype
    p = p_ref[...]
    n = n_ref[...]
    N = a.shape[0]

    big = jnp.concatenate([a, p, n], axis=0)            # (3N, D)
    rhs = big[N:, :]                                    # (2N, D) == [p; n]

    # Row-wise squared norms, accumulated in f32 (anchor norms computed once).
    big32 = big.astype(jnp.float32)
    r = jnp.sum(big32 * big32, axis=-1, keepdims=True)  # (3N, 1)

    # Single MXU pass for all needed Gram blocks, f32 accumulation.
    g = lax.dot_general(big, rhs, _CONTRACT_LAST,
                        preferred_element_type=jnp.float32)   # (3N, 2N)

    # Pairwise squared distances for every (lhs row, rhs row) pair.
    # TODO(synk): in a row/col-tiled large-N version, precompute column norms
    # as a (1, n_col) row vector once instead of transposing per tile.
    d = r + r[N:, :].T - 2.0 * g                        # (3N, 2N)

    # One EUP exp; the 4 RBF bandwidths {10,15,20,50} are integer powers
    # {30,20,15,6} of base = exp(-d/600) (exp(-0.5*d/a) == base**(300/a)).
    base = jnp.exp(d * jnp.float32(-1.0 / 600.0))
    b2 = base * base
    b3 = b2 * base
    b6 = b3 * b3
    b12 = b6 * b6
    b15 = b12 * b3
    b18 = b12 * b6
    b20 = b18 * b2
    b30 = b15 * b15
    k = b6 + b15 + b20 + b30                            # sum over bandwidths

    # Signed weights pick out the 4 useful N x N blocks of the (3N, 2N) plane:
    #   rows [0,N)   x cols [0,N)  : a-p cross term -> -2   (from +dist_pos)
    #   rows [0,N)   x cols [N,2N) : a-n cross term -> +2   (from -dist_neg)
    #   rows [N,2N)  x cols [0,N)  : p-p term       -> +1
    #   rows [2N,3N) x cols [N,2N) : n-n term       -> -1
    row = lax.broadcasted_iota(jnp.int32, (3 * N, 2 * N), 0)
    col = lax.broadcasted_iota(jnp.int32, (3 * N, 2 * N), 1)
    col_p = col < N
    w = jnp.where(row < N,
                  jnp.where(col_p, -2.0, 2.0),
                  jnp.where(row < 2 * N,
                            jnp.where(col_p, 1.0, 0.0),
                            jnp.where(col_p, 0.0, -1.0)))

    # ONE cross-lane reduction; diff == MMD(a,p) - MMD(a,n) (XX cancelled).
    diff = jnp.sum(k * w) * jnp.float32(1.0 / (N * N))

    # In-kernel epilogue: loss is a batch-level scalar, so mean == identity.
    o_ref[0] = jnp.maximum(diff + jnp.float32(margin), 0.0)


def _triplet_euclid_kernel(a_ref, p_ref, n_ref, o_ref, *,
                           margin, n_rows, block_rows):
    """Per-row triplet losses for one block of rows; emits a partial sum."""
    i = pl.program_id(0)
    a = a_ref[...].astype(jnp.float32)
    p = p_ref[...].astype(jnp.float32)
    n = n_ref[...].astype(jnp.float32)

    dist_pos = jnp.sum(jnp.square(a - p), axis=1, keepdims=True)   # (TR, 1)
    dist_neg = jnp.sum(jnp.square(a - n), axis=1, keepdims=True)   # (TR, 1)
    losses = jnp.maximum(dist_pos - dist_neg + jnp.float32(margin), 0.0)

    # Mask padded tail rows of the last (partial) block.
    row = i * block_rows + lax.broadcasted_iota(jnp.int32, (block_rows, 1), 0)
    losses = jnp.where(row < n_rows, losses, 0.0)
    o_ref[0, 0] = jnp.sum(losses)


# ----------------------------------------------------------------------------
# Wrapper ("module")
# ----------------------------------------------------------------------------
class TripletLoss:
    """JAX/Pallas port of the PyTorch TripletLoss module (no parameters)."""

    def __init__(self, margin: float = 1.0, is_euclid: bool = False):
        # NOTE: margin is baked into the kernels via functools.partial; each
        # distinct margin value triggers one retrace/recompile.
        self.margin = float(margin)
        self.is_euclid = bool(is_euclid)

    def get_name(self):
        return (f'({self.__class__.__name__}, margin:{self.margin}, '
                f'euclid:{self.is_euclid})')

    def __call__(self, anchor, positive, negative):
        assert anchor.ndim == 2
        assert anchor.shape == positive.shape == negative.shape
        N, D = anchor.shape
        if self.is_euclid:
            return self._euclid_loss(anchor, positive, negative, N, D)
        return self._mmd_loss(anchor, positive, negative)

    # -- MMD path: one fused single-step kernel ------------------------------
    def _mmd_loss(self, anchor, positive, negative):
        kernel = functools.partial(_mmd_triplet_kernel, margin=self.margin)
        out = pl.pallas_call(
            kernel,
            out_shape=jax.ShapeDtypeStruct((1,), jnp.float32),
            in_specs=[
                pl.BlockSpec(memory_space=pltpu.MemorySpace.VMEM),
                pl.BlockSpec(memory_space=pltpu.MemorySpace.VMEM),
                pl.BlockSpec(memory_space=pltpu.MemorySpace.VMEM),
            ],
            out_specs=pl.BlockSpec(memory_space=pltpu.MemorySpace.SMEM),
        )(anchor, positive, negative)
        return out[0]

    # -- Euclidean path: row-tiled, parallel grid, per-block partial sums ----
    def _euclid_loss(self, anchor, positive, negative, N, D):
        block_rows = min(256, ((N + 7) // 8) * 8)
        num_blocks = (N + block_rows - 1) // block_rows
        kernel = functools.partial(_triplet_euclid_kernel, margin=self.margin,
                                   n_rows=N, block_rows=block_rows)
        partials = pl.pallas_call(
            kernel,
            out_shape=jax.ShapeDtypeStruct((num_blocks, 1, 1), jnp.float32),
            grid=(num_blocks,),
            in_specs=[
                pl.BlockSpec((block_rows, D), lambda i: (i, 0)),
                pl.BlockSpec((block_rows, D), lambda i: (i, 0)),
                pl.BlockSpec((block_rows, D), lambda i: (i, 0)),
            ],
            out_specs=pl.BlockSpec((None, 1, 1), lambda i: (i, 0, 0)),
            compiler_params=pltpu.CompilerParams(
                dimension_semantics=("parallel",)),
        )(anchor, positive, negative)
        return jnp.sum(partials) / jnp.float32(N)


# ----------------------------------------------------------------------------
# Pure-JAX reference (full MMD, including the XX term)
# ----------------------------------------------------------------------------
def _ref_mmd(x, y):
    xx, yy, zz = x @ x.T, y @ y.T, x @ y.T
    rx = jnp.broadcast_to(jnp.diag(xx)[None, :], xx.shape)
    ry = jnp.broadcast_to(jnp.diag(yy)[None, :], yy.shape)
    dxx = rx.T + rx - 2.0 * xx
    dyy = ry.T + ry - 2.0 * yy
    dxy = rx.T + ry - 2.0 * zz
    XX = YY = XY = 0.0
    for a in (10.0, 15.0, 20.0, 50.0):
        XX = XX + jnp.exp(-0.5 * dxx / a)
        YY = YY + jnp.exp(-0.5 * dyy / a)
        XY = XY + jnp.exp(-0.5 * dxy / a)
    return jnp.mean(XX + YY - 2.0 * XY)


def _ref_triplet(anchor, positive, negative, margin=1.0, is_euclid=False):
    if is_euclid:
        dp = jnp.sum((anchor - positive) ** 2, axis=1)
        dn = jnp.sum((anchor - negative) ** 2, axis=1)
    else:
        dp = _ref_mmd(anchor, positive)
        dn = _ref_mmd(anchor, negative)
    return jnp.mean(jnp.maximum(dp - dn + margin, 0.0))


# ----------------------------------------------------------------------------
if __name__ == "__main__":
    key = jax.random.PRNGKey(0)
    k1, k2, k3 = jax.random.split(key, 3)

    N, D = 8, 32  # N samples, D features
    anchor = jax.random.normal(k1, (N, D), dtype=jnp.float32)
    positive = anchor + 0.1 * jax.random.normal(k2, (N, D), dtype=jnp.float32)
    negative = jax.random.normal(k3, (N, D), dtype=jnp.float32) + 1.0

    # Default module config: margin=1.0, is_euclid=False (MMD path).
    loss_mmd_fn = TripletLoss(margin=1.0, is_euclid=False)
    loss_mmd = jax.block_until_ready(loss_mmd_fn(anchor, positive, negative))
    ref_mmd = _ref_triplet(anchor, positive, negative, 1.0, False)
    assert jnp.allclose(loss_mmd, ref_mmd, rtol=1e-4, atol=1e-4), (loss_mmd, ref_mmd)

    # Euclidean variant.
    loss_euc_fn = TripletLoss(margin=1.0, is_euclid=True)
    loss_euc = jax.block_until_ready(loss_euc_fn(anchor, positive, negative))
    ref_euc = _ref_triplet(anchor, positive, negative, 1.0, True)
    assert jnp.allclose(loss_euc, ref_euc, rtol=1e-4, atol=1e-4), (loss_euc, ref_euc)

    print("KERNEL_OK")
</pallas_src>

<mosaic_0001>
module attributes {stable_mosaic.version = 11 : i64} {
  func.func @_mmd_triplet_kernel(%arg0: memref<8x32xf32, #tpu.memory_space<vmem>>, %arg1: memref<8x32xf32, #tpu.memory_space<vmem>>, %arg2: memref<8x32xf32, #tpu.memory_space<vmem>>, %arg3: memref<1xf32, #tpu.memory_space<smem>>) attributes {dimension_semantics = [], scalar_prefetch = 0 : i64, scratch_operands = 0 : i64, tpu.core_type = #tpu.core_type<tc>} {
    %c0 = arith.constant 0 : index
    %c0_0 = arith.constant 0 : index
    %0 = vector.load %arg0[%c0, %c0_0] : memref<8x32xf32, #tpu.memory_space<vmem>>, vector<8x32xf32>
    %c0_1 = arith.constant 0 : index
    %c0_2 = arith.constant 0 : index
    %1 = vector.load %arg1[%c0_1, %c0_2] : memref<8x32xf32, #tpu.memory_space<vmem>>, vector<8x32xf32>
    %c0_3 = arith.constant 0 : index
    %c0_4 = arith.constant 0 : index
    %2 = vector.load %arg2[%c0_3, %c0_4] : memref<8x32xf32, #tpu.memory_space<vmem>>, vector<8x32xf32>
    %3 = tpu.concatenate %0, %1, %2 in 0 : vector<8x32xf32>, vector<8x32xf32>, vector<8x32xf32> -> vector<24x32xf32>
    %4 = vector.extract_strided_slice %3 {offsets = [8, 0], sizes = [16, 32], strides = [1, 1]} : vector<24x32xf32> to vector<16x32xf32>
    %5 = arith.mulf %3, %3 : vector<24x32xf32>
    %cst = arith.constant dense<0.000000e+00> : vector<24xf32>
    %6 = vector.multi_reduction <add>, %5, %cst [1] : vector<24x32xf32> to vector<24xf32>
    %7 = vector.shape_cast %6 : vector<24xf32> to vector<24x1xf32>
    %cst_5 = arith.constant dense<0.000000e+00> : vector<24x16xf32>
    %8 = tpu.matmul %3, %4, %cst_5 {dimension_numbers = #tpu.dot_dimension_numbers<[1], [1], [0], [0], [0, 0, 1, 0], [], []>} : vector<24x32xf32>, vector<16x32xf32>, vector<24x16xf32> -> vector<24x16xf32>
    %9 = vector.extract_strided_slice %7 {offsets = [8, 0], sizes = [16, 1], strides = [1, 1]} : vector<24x1xf32> to vector<16x1xf32>
    %10 = tpu.transpose %9, [1, 0] : vector<16x1xf32> -> vector<1x16xf32>
    %11 = vector.broadcast %7 : vector<24x1xf32> to vector<24x16xf32>
    %12 = vector.broadcast %10 : vector<1x16xf32> to vector<24x16xf32>
    %13 = arith.addf %11, %12 : vector<24x16xf32>
    %cst_6 = arith.constant 2.000000e+00 : f32
    %14 = vector.broadcast %cst_6 : f32 to vector<24x16xf32>
    %15 = arith.mulf %14, %8 : vector<24x16xf32>
    %16 = arith.subf %13, %15 : vector<24x16xf32>
    %cst_7 = arith.constant -0.00166666671 : f32
    %17 = vector.broadcast %cst_7 : f32 to vector<24x16xf32>
    %18 = arith.mulf %16, %17 : vector<24x16xf32>
    %19 = math.exp %18 : vector<24x16xf32>
    %20 = arith.mulf %19, %19 : vector<24x16xf32>
    %21 = arith.mulf %20, %19 : vector<24x16xf32>
    %22 = arith.mulf %21, %21 : vector<24x16xf32>
    %23 = arith.mulf %22, %22 : vector<24x16xf32>
    %24 = arith.mulf %23, %21 : vector<24x16xf32>
    %25 = arith.mulf %23, %22 : vector<24x16xf32>
    %26 = arith.mulf %25, %20 : vector<24x16xf32>
    %27 = arith.mulf %24, %24 : vector<24x16xf32>
    %28 = arith.addf %22, %24 : vector<24x16xf32>
    %29 = arith.addf %28, %26 : vector<24x16xf32>
    %30 = arith.addf %29, %27 : vector<24x16xf32>
    %31 = tpu.iota {dimensions = array<i32: 0>} : vector<24x16xi32>
    %32 = tpu.iota {dimensions = array<i32: 1>} : vector<24x16xi32>
    %c8_i32 = arith.constant 8 : i32
    %33 = vector.broadcast %c8_i32 : i32 to vector<24x16xi32>
    %34 = arith.cmpi slt, %32, %33 : vector<24x16xi32>
    %c8_i32_8 = arith.constant 8 : i32
    %35 = vector.broadcast %c8_i32_8 : i32 to vector<24x16xi32>
    %36 = arith.cmpi slt, %31, %35 : vector<24x16xi32>
    %cst_9 = arith.constant -2.000000e+00 : f32
    %cst_10 = arith.constant 2.000000e+00 : f32
    %37 = vector.broadcast %cst_9 : f32 to vector<24x16xf32>
    %38 = vector.broadcast %cst_10 : f32 to vector<24x16xf32>
    %39 = arith.select %34, %37, %38 : vector<24x16xi1>, vector<24x16xf32>
    %c16_i32 = arith.constant 16 : i32
    %40 = vector.broadcast %c16_i32 : i32 to vector<24x16xi32>
    %41 = arith.cmpi slt, %31, %40 : vector<24x16xi32>
    %cst_11 = arith.constant 1.000000e+00 : f32
    %cst_12 = arith.constant 0.000000e+00 : f32
    %42 = vector.broadcast %cst_11 : f32 to vector<24x16xf32>
    %43 = vector.broadcast %cst_12 : f32 to vector<24x16xf32>
    %44 = arith.select %34, %42, %43 : vector<24x16xi1>, vector<24x16xf32>
    %cst_13 = arith.constant 0.000000e+00 : f32
    %cst_14 = arith.constant -1.000000e+00 : f32
    %45 = vector.broadcast %cst_13 : f32 to vector<24x16xf32>
    %46 = vector.broadcast %cst_14 : f32 to vector<24x16xf32>
    %47 = arith.select %34, %45, %46 : vector<24x16xi1>, vector<24x16xf32>
    %48 = arith.select %41, %44, %47 : vector<24x16xi1>, vector<24x16xf32>
    %49 = arith.select %36, %39, %48 : vector<24x16xi1>, vector<24x16xf32>
    %50 = arith.mulf %30, %49 : vector<24x16xf32>
    %51 = vector.shape_cast %50 : vector<24x16xf32> to vector<1x24x16xf32>
    %cst_15 = arith.constant dense<0.000000e+00> : vector<1xf32>
    %52 = vector.multi_reduction <add>, %51, %cst_15 [1, 2] : vector<1x24x16xf32> to vector<1xf32>
    %53 = vector.shape_cast %52 : vector<1xf32> to vector<1x1x1xf32>
    %54 = vector.extract %53[0, 0, 0] : f32 from vector<1x1x1xf32>
    %cst_16 = arith.constant 1.562500e-02 : f32
    %55 = arith.mulf %54, %cst_16 : f32
    %cst_17 = arith.constant 1.000000e+00 : f32
    %56 = arith.addf %55, %cst_17 : f32
    %cst_18 = arith.constant 0.000000e+00 : f32
    %57 = arith.maximumf %56, %cst_18 : f32
    %c0_19 = arith.constant 0 : index
    %58 = memref.load %arg3[%c0_19] : memref<1xf32, #tpu.memory_space<smem>>
    memref.store %57, %arg3[%c0_19] : memref<1xf32, #tpu.memory_space<smem>>
    return
  }
}

</mosaic_0001>

<llo_original>
// kernel: tpu_custom_call.1
$region0: #{tpu_custom_call.1}
  #allocation0 [shape = 'u32[]', space=smem, size = 0x4, offset = 0x4, fixed_abs, tag = 'smem constant byte address 0x4 - core index']
  #allocation1 [shape = 'u32[72,128]{1,0:T(1,128)}', space=vmem, size = 0x9000, scoped, tag = 'internal scratch']
  %s0 = inlined_call_operand.hbm [shape: f32[8,32], index: 0, kind: input, shape index: {}]
  %s1 = inlined_call_operand.hbm [shape: f32[8,32], index: 1, kind: input, shape index: {}]
  %s2 = inlined_call_operand.hbm [shape: f32[8,32], index: 2, kind: input, shape index: {}]
  %s3 = inlined_call_operand.hbm [shape: f32[1], index: 3, kind: output, shape index: {}]
  %s4 = sld [smem:[#allocation0]]
  $region34: #{tpu_custom_call.1} parent=0
    _
  %s6 = ssub.s32 1, %s4
  %s7 = scalar_select 0, %s6, %s4
  $region1: #{tpu_custom_call.1} parent=0
    #allocation2 [shape = 'u8[4096]{0}', space=vmem, size = 0x1000, scoped, tag = 'input window, operand 0, single buffered']
    #allocation3 [shape = 's32[1]{0}', space=sflag, size = 0x4, scoped, tag = 'scoped memory for tpu_custom_call.1']
    #allocation4 [shape = 's32[1]{0}', space=sflag, size = 0x4, scoped, tag = 'scoped memory for tpu_custom_call.1']
    #allocation5 [shape = 'u8[4096]{0}', space=vmem, size = 0x1000, scoped, tag = 'input window, operand 1, single buffered']
    #allocation6 [shape = 's32[1]{0}', space=sflag, size = 0x4, scoped, tag = 'scoped memory for tpu_custom_call.1']
    #allocation7 [shape = 'u8[4096]{0}', space=vmem, size = 0x1000, scoped, tag = 'input window, operand 2, single buffered']
    #allocation8 [shape = 'u8[512]{0}', space=smem, size = 0x200, scoped, tag = 'output window, operand 0, single buffered']
    %8 = vsyncpa [#allocation3], 0
    %9 = vsyncpa [#allocation6], 0
    %10 = vsyncpa [#allocation4], 0
    // Predicated region
    $region2: #{tpu_custom_call.1} parent=1 // pred_check
      _
    $region3: #{tpu_custom_call.1} parent=1 // pred_check_branch
      %12 = sbr.rel (0) target = $region5
    $region4: #{tpu_custom_call.1} parent=1 // pred_region
      %14 = vsyncadd [#allocation3], 0
      %s16 = sshll.u32 %s0, 4
      %s17 = int_to_ptr.hbm [resolvable:$true] %s16
      %s18 = sshll.u32 [#allocation2], 4
      %s19 = int_to_ptr.vmem [resolvable:$true] %s18
      %21 = dma.hbm_to_vmem [thread:$0]  %s17, 128, %s19, [#allocation3]
    $region5: #{tpu_custom_call.1} parent=1 // pred_fallthru
      _
    // Predicated region
    $region6: #{tpu_custom_call.1} parent=1 // pred_check
      _
    $region7: #{tpu_custom_call.1} parent=1 // pred_check_branch
      %23 = sbr.rel (0) target = $region9
    $region8: #{tpu_custom_call.1} parent=1 // pred_region
      %25 = vsyncadd [#allocation6], 0
      %s27 = sshll.u32 %s1, 4
      %s28 = int_to_ptr.hbm [resolvable:$true] %s27
      %s29 = sshll.u32 [#allocation5], 4
      %s30 = int_to_ptr.vmem [resolvable:$true] %s29
      %32 = dma.hbm_to_vmem [thread:$0]  %s28, 128, %s30, [#allocation6]
    $region9: #{tpu_custom_call.1} parent=1 // pred_fallthru
      _
    // Predicated region
    $region10: #{tpu_custom_call.1} parent=1 // pred_check
      _
    $region11: #{tpu_custom_call.1} parent=1 // pred_check_branch
      %34 = sbr.rel (0) target = $region13
    $region12: #{tpu_custom_call.1} parent=1 // pred_region
      %36 = vsyncadd [#allocation6], 0
      %s38 = sshll.u32 %s2, 4
      %s39 = int_to_ptr.hbm [resolvable:$true] %s38
      %s40 = sshll.u32 [#allocation7], 4
      %s41 = int_to_ptr.vmem [resolvable:$true] %s40
      %43 = dma.hbm_to_vmem [thread:$0]  %s39, 128, %s41, [#allocation6]
    $region13: #{tpu_custom_call.1} parent=1 // pred_fallthru
      _
    // Predicated region
    $region14: #{tpu_custom_call.1} parent=1 // pred_check
      _
    $region15: #{tpu_custom_call.1} parent=1 // pred_check_branch
      %45 = sbr.rel (0) target = $region17
    $region16: #{tpu_custom_call.1} parent=1 // pred_region
      %47 = dma.done [#allocation3], 128
    $region17: #{tpu_custom_call.1} parent=1 // pred_fallthru
      _
    // Predicated region
    $region18: #{tpu_custom_call.1} parent=1 // pred_check
      _
    $region19: #{tpu_custom_call.1} parent=1 // pred_check_branch
      %49 = sbr.rel (0) target = $region21
    $region20: #{tpu_custom_call.1} parent=1 // pred_region
      %51 = dma.done [#allocation6], 128
    $region21: #{tpu_custom_call.1} parent=1 // pred_fallthru
      _
    // Predicated region
    $region22: #{tpu_custom_call.1} parent=1 // pred_check
      _
    $region23: #{tpu_custom_call.1} parent=1 // pred_check_branch
      %53 = sbr.rel (0) target = $region25
    $region24: #{tpu_custom_call.1} parent=1 // pred_region
      %55 = dma.done [#allocation6], 128
    $region25: #{tpu_custom_call.1} parent=1 // pred_fallthru
      _
    %v56 = vld [vmem:[#allocation2] sm:$0xff]
    %v57 = vld [vmem:[#allocation5] sm:$0xff]
    %v58 = vld [vmem:[#allocation7] sm:$0xff]
    %v59 = vmul.f32 %v56, %v56
    %v60 = vmul.f32 %v57, %v57
    %v61 = vmul.f32 %v58, %v58
    %vm62 = vcmask 261120
    %v63 = vsel %vm62, %v59, 0.0
    %64 = vadd.xlane.f32.xlu0 %v63
    %v65 = vpop.xlane.xlu0 %64
    %v66 = vsel %vm62, %v60, 0.0
    %67 = vadd.xlane.f32.xlu0 %v66
    %v68 = vpop.xlane.xlu0 %67
    %v69 = vsel %vm62, %v61, 0.0
    %70 = vadd.xlane.f32.xlu0 %v69
    %v71 = vpop.xlane.xlu0 %70
    %v73 = vsel %vm62, %v56, 0
    %v76 = vsel %vm62, %v57, 0
    %v79 = vsel %vm62, %v58, 0
    %81 = vmatpush.xpose.msra.mxu0 0.0
    %82 = vmatpush.xpose.msra.mxu0 0.0
    %83 = vmatpush.xpose.msra.mxu0 0.0
    %84 = vmatpush.xpose.msra.mxu0 0.0
    %85 = vmatpush.xpose.msra.mxu0 0.0
    %86 = vmatpush.xpose.msra.mxu0 0.0
    %87 = vmatpush.xpose.msra.mxu0 0.0
    %88 = vmatpush.xpose.msra.mxu0 0.0
    %89 = vmatpush.xpose.msra.mxu0 0.0
    %90 = vmatpush.xpose.msra.mxu0 0.0
    %91 = vmatpush.xpose.msra.mxu0 0.0
    %92 = vmatpush.xpose.msra.mxu0 0.0
    %93 = vmatpush.xpose.msra.mxu0 0.0
    %94 = vmatpush.xpose.msra.mxu0 0.0
    %95 = vmatpush.xpose.msra.mxu0 %v79
    %96 = vmatpush.xpose.msra.mxu0 %v76
    %97 = vmatmul.f32.gmra.mxu0 %v73
    %v98 = vpop.f32.mrf.mxu0
    %v99 = vadd.f32 0.0, %v98
    %100 = vmatmul.f32.gmra.mxu0 %v76
    %v101 = vpop.f32.mrf.mxu0
    %v102 = vadd.f32 0.0, %v101
    %103 = vmatmul.f32.gmra.mxu0 %v79
    %v104 = vpop.f32.mrf.mxu0
    %v105 = vadd.f32 0.0, %v104
    %106 = vdwg.mxu0
    %107 = vxpose.xlu0.b32.start [1/16] %v68, 128
    %108 = vxpose.xlu0.b32.cont [2/16] %v71, 128
    %109 = vxpose.xlu0.b32.cont [3/16] 0.0, 128
    %110 = vxpose.xlu0.b32.cont [4/16] 0.0, 128
    %111 = vxpose.xlu0.b32.cont [5/16] 0.0, 128
    %112 = vxpose.xlu0.b32.cont [6/16] 0.0, 128
    %113 = vxpose.xlu0.b32.cont [7/16] 0.0, 128
    %114 = vxpose.xlu0.b32.cont [8/16] 0.0, 128
    %115 = vxpose.xlu0.b32.cont [9/16] 0.0, 128
    %116 = vxpose.xlu0.b32.cont [10/16] 0.0, 128
    %117 = vxpose.xlu0.b32.cont [11/16] 0.0, 128
    %118 = vxpose.xlu0.b32.cont [12/16] 0.0, 128
    %119 = vxpose.xlu0.b32.cont [13/16] 0.0, 128
    %120 = vxpose.xlu0.b32.cont [14/16] 0.0, 128
    %121 = vxpose.xlu0.b32.cont [15/16] 0.0, 128
    %122 = vxpose.xlu0.b32.end [16/16] 0.0, 128
    %v123 = vpop.trf.xlu0
    %v124 = vpop.trf.xlu0
    %v125 = vpop.trf.xlu0
    %v126 = vpop.trf.xlu0
    %v127 = vpop.trf.xlu0
    %v128 = vpop.trf.xlu0
    %v129 = vpop.trf.xlu0
    %v130 = vpop.trf.xlu0
    %v131 = vpop.trf.xlu0
    %v132 = vpop.trf.xlu0
    %v133 = vpop.trf.xlu0
    %v134 = vpop.trf.xlu0
    %v135 = vpop.trf.xlu0
    %v136 = vpop.trf.xlu0
    %v137 = vpop.trf.xlu0
    %v138 = vpop.trf.xlu0
    %v139 = vperm.slane %v123, 0
    %v140 = vadd.f32 %v65, %v139
    %v141 = vadd.f32 %v68, %v139
    %v142 = vadd.f32 %v71, %v139
    %v143 = vmul.f32 %v99, 2.0
    %v144 = vmul.f32 %v102, 2.0
    %v145 = vmul.f32 %v105, 2.0
    %v146 = vsub.f32 %v140, %v143
    %v147 = vsub.f32 %v141, %v144
    %v148 = vsub.f32 %v142, %v145
    %v149 = vmul.f32 %v146, -0.0016666667
    %v150 = vmul.f32 %v147, -0.0016666667
    %v151 = vmul.f32 %v148, -0.0016666667
    %v152 = vmul.f32 %v149, 1.442695
    %v153 = vpow.pop %v152
    %v154 = vmul.f32 %v150, 1.442695
    %v155 = vpow.pop %v154
    %v156 = vmul.f32 %v151, 1.442695
    %v157 = vpow.pop %v156
    %v158 = vmul.f32 %v153, %v153
    %v159 = vmul.f32 %v155, %v155
    %v160 = vmul.f32 %v157, %v157
    %v161 = vmul.f32 %v158, %v153
    %v162 = vmul.f32 %v159, %v155
    %v163 = vmul.f32 %v160, %v157
    %v164 = vmul.f32 %v161, %v161
    %v165 = vmul.f32 %v162, %v162
    %v166 = vmul.f32 %v163, %v163
    %v167 = vmul.f32 %v164, %v164
    %v168 = vmul.f32 %v165, %v165
    %v169 = vmul.f32 %v166, %v166
    %v170 = vmul.f32 %v167, %v161
    %v171 = vmul.f32 %v168, %v162
    %v172 = vmul.f32 %v169, %v163
    %v173 = vmul.f32 %v167, %v164
    %v174 = vmul.f32 %v168, %v165
    %v175 = vmul.f32 %v169, %v166
    %v176 = vmul.f32 %v173, %v158
    %v177 = vmul.f32 %v174, %v159
    %v178 = vmul.f32 %v175, %v160
    %v179 = vmul.f32 %v170, %v170
    %v180 = vmul.f32 %v171, %v171
    %v181 = vmul.f32 %v172, %v172
    %v182 = vadd.f32 %v164, %v170
    %v183 = vadd.f32 %v165, %v171
    %v184 = vadd.f32 %v166, %v172
    %v185 = vadd.f32 %v182, %v176
    %v186 = vadd.f32 %v183, %v177
    %v187 = vadd.f32 %v184, %v178
    %v188 = vadd.f32 %v185, %v179
    %v189 = vadd.f32 %v186, %v180
    %v190 = vadd.f32 %v187, %v181
    %v191 = vlaneseq
    %v192 = vshrl.u32 %v191, 7
    %v193 = vadd.s32 %v192, 8
    %v194 = vadd.s32 %v192, 16
    %v195 = vlaneseq
    %v196 = vand.u32 %v195, 127
    %vm197 = vcmp.lt.s32.totalorder %v196, 8
    %vm198 = vcmp.lt.s32.totalorder %v192, 8
    %vm199 = vcmp.lt.s32.totalorder %v193, 8
    %vm200 = vcmp.lt.s32.totalorder %v194, 8
    %v201 = vsel %vm197, -2.0, 2.0
    %vm202 = vcmp.lt.s32.totalorder %v192, 16
    %vm203 = vcmp.lt.s32.totalorder %v193, 16
    %vm204 = vcmp.lt.s32.totalorder %v194, 16
    %v205 = vsel %vm197, 1.0, 0.0
    %v206 = vsel %vm197, 0.0, -1.0
    %v207 = vsel %vm202, %v205, %v206
    %v208 = vsel %vm203, %v205, %v206
    %v209 = vsel %vm204, %v205, %v206
    %v210 = vsel %vm198, %v201, %v207
    %v211 = vsel %vm199, %v201, %v208
    %v212 = vsel %vm200, %v201, %v209
    %v213 = vmul.f32 %v188, %v210
    %v214 = vmul.f32 %v189, %v211
    %v215 = vmul.f32 %v190, %v212
    %vm216 = vcmask 130048
    %v217 = vsel %vm216, %v213, 0.0
    %v218 = vsel %vm216, %v214, 0.0
    %v219 = vadd.f32 %v217, %v218
    %v220 = vsel %vm216, %v215, 0.0
    %v221 = vadd.f32 %v219, %v220
    %222 = vadd.xlane.f32.xlu0 %v221
    %v223 = vpop.xlane.xlu0 %222
    %v224 = vrot.slane %v223, 4
    %v225 = vadd.f32 %v223, %v224
    %v226 = vrot.slane %v225, 2
    %v227 = vadd.f32 %v225, %v226
    %v228 = vrot.slane %v227, 1
    %v229 = vadd.f32 %v227, %v228
    %s230 = vtos %v229
    %s231 = smul.f32 %s230, 0.015625
    %s232 = sadd.f32 %s231, 1.0
    %s233 = smax.f32 %s232, 0.0
    %s234 = scalar_lea.smem [#allocation8], 0
    %235 = sst [smem:[%s234]] %s233
    // Predicated region
    $region26: #{tpu_custom_call.1} parent=1 // pred_check
      _
    $region27: #{tpu_custom_call.1} parent=1 // pred_check_branch
      %237 = sbr.rel (0) target = $region29
    $region28: #{tpu_custom_call.1} parent=1 // pred_region
      %239 = vsyncadd [#allocation4], 0
      %s241 = sshll.u32 %s3, 4
      %s242 = int_to_ptr.hbm [resolvable:$true] %s241
      %244 = dma.smem_to_hbm [#allocation8], 16, %s242, [#allocation4]
    $region29: #{tpu_custom_call.1} parent=1 // pred_fallthru
      _
    // Predicated region
    $region30: #{tpu_custom_call.1} parent=1 // pred_check
      _
    $region31: #{tpu_custom_call.1} parent=1 // pred_check_branch
      %246 = sbr.rel (0) target = $region33
    $region32: #{tpu_custom_call.1} parent=1 // pred_region
      %248 = dma.done [#allocation4], 16
    $region33: #{tpu_custom_call.1} parent=1 // pred_fallthru
      _
    %249 = sfence
    %250 = vsyncpa [#allocation3], 1
    %251 = vsyncpa [#allocation6], 1
    %252 = vsyncpa [#allocation4], 1

</llo_original>
